<compile_context>
chip_gen: v5e
topology: v5e:2x2
jax: 0.10.0
libtpu: 0.0.40
codegen_flags: <defaults>
</compile_context>

<pallas_src>
import functools

import jax
import jax.numpy as jnp
from jax.experimental import pallas as pl
from jax.experimental.pallas import tpu as pltpu

LANE = 128


def _round_up(x, m):
    return (x + m - 1) // m * m


# ---------------------------------------------------------------------------
# Pallas kernel: fused aggregation  out = relu(self @ W_self + neigh_mean @ W_neigh)
# ---------------------------------------------------------------------------
def _fused_agg_kernel(self_ref, neigh_ref, ws_ref, wn_ref, o_ref):
    """self/neigh: [TM, D*] bf16; ws/wn: [D*, Dp] bf16; o: [TM, Dp] bf16."""
    acc = jnp.dot(self_ref[...], ws_ref[...], preferred_element_type=jnp.float32)
    acc = acc + jnp.dot(neigh_ref[...], wn_ref[...],
                        preferred_element_type=jnp.float32)
    o_ref[...] = jnp.maximum(acc, 0.0).astype(o_ref.dtype)


def fused_agg(self_feat, neigh_mean, w_self, w_neigh, *, max_tile_m=1024):
    """Metapath-batched fused aggregation.

    self_feat:  [n_mp, M, Ds]  bf16
    neigh_mean: [n_mp, M, Dn]  bf16  (mean over S neighbors, taken in XLA)
    w_self:     [n_mp, Ds, Dp] bf16  (Dp = 128-padded output width)
    w_neigh:    [n_mp, Dn, Dp] bf16
    returns     [n_mp, M, Dp]  bf16
    """
    n_mp, M, Ds = self_feat.shape
    Dn = neigh_mean.shape[-1]
    Dp = w_self.shape[-1]

    # No full-tensor row padding: tile_m == M when it fits, else a 16-aligned
    # tile with a masked partial last block.
    tile_m = M if M <= max_tile_m else max_tile_m
    grid = (n_mp, pl.cdiv(M, tile_m))

    return pl.pallas_call(
        _fused_agg_kernel,
        out_shape=jax.ShapeDtypeStruct((n_mp, M, Dp), jnp.bfloat16),
        grid_spec=pltpu.PrefetchScalarGridSpec(
            num_scalar_prefetch=0,
            grid=grid,
            in_specs=[
                pl.BlockSpec((None, tile_m, Ds), lambda m, i: (m, i, 0)),
                pl.BlockSpec((None, tile_m, Dn), lambda m, i: (m, i, 0)),
                pl.BlockSpec((None, Ds, Dp), lambda m, i: (m, 0, 0)),
                pl.BlockSpec((None, Dn, Dp), lambda m, i: (m, 0, 0)),
            ],
            out_specs=pl.BlockSpec((None, tile_m, Dp), lambda m, i: (m, i, 0)),
        ),
        compiler_params=pltpu.CompilerParams(
            dimension_semantics=("parallel", "parallel")),
    )(self_feat, neigh_mean, w_self, w_neigh)


# ---------------------------------------------------------------------------
# BipartiteGCN forward (glue in plain XLA, fused aggregations in Pallas)
# ---------------------------------------------------------------------------
def bipartite_gcn_forward(params, feats, edge_embs, node2edge_idxs,
                          edge_node_adjs, train_ids, *, n_mp, depth, d_out):
    """feats: [N, feats_dim]; edge_embs: [n_mp, E, edge_dim];
    node2edge_idxs: [n_mp, N, S] int32 -> edge ids;
    edge_node_adjs: [n_mp, E, 2] int32 -> node ids.
    params["layers"][l][*] are pre-packed bf16 weights padded to 128 lanes.
    """
    N = feats.shape[0]

    # prep: node / edge projections (tiny -> plain XLA). layer_idx 0/1 shared.
    feats_proj = feats.astype(jnp.float32) @ params["w_prep"]              # [N, D]
    D = feats_proj.shape[-1]
    all_feats = jnp.broadcast_to(feats_proj[None], (n_mp, N, D)).astype(jnp.bfloat16)
    dummy_feats = all_feats
    all_edges = jnp.einsum("med,mdk->mek", edge_embs,
                           params["w_edge_prep"]).astype(jnp.bfloat16)     # [n_mp, E, D]

    # TODO(synk): at scale, fuse this gather+mean into the kernel via
    # scalar-prefetch index_maps / manual DMA gather so the S-expanded tensor
    # never touches HBM; here the XLA gather fuses with the mean reduction.
    gather_mean = jax.vmap(
        lambda table, idx: jnp.mean(
            jnp.take(table, idx, axis=0).astype(jnp.float32), axis=1
        ).astype(jnp.bfloat16))

    skip_buffer = []
    for layer_idx in range(depth):
        lp = params["layers"][layer_idx]

        # ---- edge aggregation: each edge + mean of its 2 endpoint nodes ----
        node_mean = gather_mean(all_feats, edge_node_adjs)                 # [n_mp, E, D]
        next_edges = fused_agg(all_edges, node_mean,
                               lp["w_e_self"], lp["w_e_node"])[..., :d_out]

        # ---- node aggregation: each node + mean of its S incident OLD edges ----
        node_self = dummy_feats if layer_idx == 0 else all_feats
        edge_mean = gather_mean(all_edges, node2edge_idxs)                 # [n_mp, N, D]
        next_feats = fused_agg(node_self, edge_mean,
                               lp["w_n_self"], lp["w_n_edge"])[..., :d_out]

        # dropout is identity at inference
        skip_buffer.append(next_feats)
        all_feats = next_feats
        all_edges = next_edges

    output = jnp.concatenate(skip_buffer, axis=-1)[:, train_ids]           # [n_mp, T, out_dim]
    output = output.astype(jnp.float32)

    # mp_agg: softmax attention over metapaths (tiny -> plain XLA)
    scores = jnp.einsum("mtd,d->mt", jnp.tanh(output), params["a_mp"])     # [n_mp, T]
    weights = jax.nn.softmax(scores, axis=0)
    agg = jnp.einsum("mt,mtd->td", weights, output)                        # [T, out_dim]

    # fc: final classifier (tiny -> plain XLA)
    logits = agg @ params["w_fc"] + params["b_fc"]                         # [T, n_classes]
    return logits, weights


# ---------------------------------------------------------------------------
# Deterministic parameter construction + one-time weight packing
# ---------------------------------------------------------------------------
def make_params(key, *, feats_dim, edge_dim, prep_len, n_mp, depth, n_head,
                n_classes):
    d = prep_len
    do = (prep_len // n_head) * n_head     # stacked-heads output dim (== prep_len)
    out_dim = do * depth

    def nrm(k, shape, scale=0.1):
        return scale * jax.random.normal(k, shape, jnp.float32)

    keys = iter(jax.random.split(key, 8 + 4 * depth))
    params = {
        "w_prep": nrm(next(keys), (feats_dim, d)),
        "w_edge_prep": nrm(next(keys), (n_mp, edge_dim, d)),
        "layers": [],
        "a_mp": nrm(next(keys), (out_dim,)),
        "w_fc": nrm(next(keys), (out_dim, n_classes)),
        "b_fc": nrm(next(keys), (n_classes,)),
    }
    for _ in range(depth):
        params["layers"].append({
            "w_e_self": nrm(next(keys), (n_mp, d, do)),
            "w_e_node": nrm(next(keys), (n_mp, d, do)),
            "w_n_self": nrm(next(keys), (n_mp, d, do)),
            "w_n_edge": nrm(next(keys), (n_mp, d, do)),
        })
    return params


def pack_params(params):
    """One-time packing (hoisted out of the forward trace): pad the per-layer
    aggregation weights to a 128-lane output width and cast to bf16."""
    def pad_w(w):
        do = w.shape[-1]
        dp = _round_up(do, LANE)
        return jnp.pad(w, ((0, 0), (0, 0), (0, dp - do))).astype(jnp.bfloat16)

    packed = dict(params)
    packed["layers"] = [{k: pad_w(v) for k, v in lp.items()}
                        for lp in params["layers"]]
    return packed


if __name__ == "__main__":
    # Small, deterministic problem sizes.
    N_NODES, FEATS_DIM = 64, 16
    N_EDGES, EDGE_DIM = 128, 8
    S = 8                    # incident edges per node
    N_MP, N_HEAD, DEPTH = 2, 2, 2
    PREP_LEN = 32
    N_CLASSES = 4
    N_TRAIN = 16

    key = jax.random.PRNGKey(0)
    k_feat, k_edge, k_n2e, k_adj, k_param = jax.random.split(key, 5)

    feats = jax.random.normal(k_feat, (N_NODES, FEATS_DIM), jnp.float32)
    edge_embs = jax.random.normal(k_edge, (N_MP, N_EDGES, EDGE_DIM), jnp.float32)
    node2edge_idxs = jax.random.randint(k_n2e, (N_MP, N_NODES, S), 0, N_EDGES,
                                        dtype=jnp.int32)
    edge_node_adjs = jax.random.randint(k_adj, (N_MP, N_EDGES, 2), 0, N_NODES,
                                        dtype=jnp.int32)
    train_ids = jnp.arange(N_TRAIN, dtype=jnp.int32)

    params = make_params(k_param, feats_dim=FEATS_DIM, edge_dim=EDGE_DIM,
                         prep_len=PREP_LEN, n_mp=N_MP, depth=DEPTH,
                         n_head=N_HEAD, n_classes=N_CLASSES)
    packed = pack_params(params)           # one-time weight packing, outside jit

    d_out = (PREP_LEN // N_HEAD) * N_HEAD  # per-layer real output width
    fwd = jax.jit(functools.partial(bipartite_gcn_forward,
                                    n_mp=N_MP, depth=DEPTH, d_out=d_out))
    logits, weights = fwd(packed, feats, edge_embs, node2edge_idxs,
                          edge_node_adjs, train_ids)
    jax.block_until_ready((logits, weights))

    assert logits.shape == (N_TRAIN, N_CLASSES), logits.shape
    assert weights.shape == (N_MP, N_TRAIN), weights.shape
    assert bool(jnp.all(jnp.isfinite(logits))) and bool(jnp.all(jnp.isfinite(weights)))
    print("KERNEL_OK")
</pallas_src>

<mosaic_0001>
module attributes {stable_mosaic.version = 11 : i64} {
  func.func @_fused_agg_kernel(%arg0: i32, %arg1: i32, %arg2: memref<1x128x32xbf16, #tpu.memory_space<vmem>>, %arg3: memref<1x128x32xbf16, #tpu.memory_space<vmem>>, %arg4: memref<1x32x128xbf16, #tpu.memory_space<vmem>>, %arg5: memref<1x32x128xbf16, #tpu.memory_space<vmem>>, %arg6: memref<1x128x128xbf16, #tpu.memory_space<vmem>>) attributes {dimension_semantics = [#tpu.dimension_semantics<parallel>, #tpu.dimension_semantics<parallel>], iteration_bounds = array<i64: 2, 1>, scalar_prefetch = 0 : i64, scratch_operands = 0 : i64, tpu.core_type = #tpu.core_type<tc>, window_params = [{transform_indices = @transform_0, window_bounds = array<i64: 1, 128, 32>}, {transform_indices = @transform_1, window_bounds = array<i64: 1, 128, 32>}, {transform_indices = @transform_2, window_bounds = array<i64: 1, 32, 128>}, {transform_indices = @transform_3, window_bounds = array<i64: 1, 32, 128>}, {transform_indices = @transform_4, window_bounds = array<i64: 1, 128, 128>}]} {
    %c0 = arith.constant 0 : index
    %c0_0 = arith.constant 0 : index
    %c0_1 = arith.constant 0 : index
    %0 = vector.load %arg2[%c0, %c0_0, %c0_1] : memref<1x128x32xbf16, #tpu.memory_space<vmem>>, vector<1x128x32xbf16>
    %1 = vector.shape_cast %0 : vector<1x128x32xbf16> to vector<128x32xbf16>
    %c0_2 = arith.constant 0 : index
    %c0_3 = arith.constant 0 : index
    %c0_4 = arith.constant 0 : index
    %2 = vector.load %arg4[%c0_2, %c0_3, %c0_4] : memref<1x32x128xbf16, #tpu.memory_space<vmem>>, vector<1x32x128xbf16>
    %3 = vector.shape_cast %2 : vector<1x32x128xbf16> to vector<32x128xbf16>
    %cst = arith.constant dense<0.000000e+00> : vector<128x128xf32>
    %4 = tpu.matmul %1, %3, %cst {dimension_numbers = #tpu.dot_dimension_numbers<[1], [0], [0], [1], [0, 0, 1, 1], [], []>} : vector<128x32xbf16>, vector<32x128xbf16>, vector<128x128xf32> -> vector<128x128xf32>
    %c0_5 = arith.constant 0 : index
    %c0_6 = arith.constant 0 : index
    %c0_7 = arith.constant 0 : index
    %5 = vector.load %arg3[%c0_5, %c0_6, %c0_7] : memref<1x128x32xbf16, #tpu.memory_space<vmem>>, vector<1x128x32xbf16>
    %6 = vector.shape_cast %5 : vector<1x128x32xbf16> to vector<128x32xbf16>
    %c0_8 = arith.constant 0 : index
    %c0_9 = arith.constant 0 : index
    %c0_10 = arith.constant 0 : index
    %7 = vector.load %arg5[%c0_8, %c0_9, %c0_10] : memref<1x32x128xbf16, #tpu.memory_space<vmem>>, vector<1x32x128xbf16>
    %8 = vector.shape_cast %7 : vector<1x32x128xbf16> to vector<32x128xbf16>
    %cst_11 = arith.constant dense<0.000000e+00> : vector<128x128xf32>
    %9 = tpu.matmul %6, %8, %cst_11 {dimension_numbers = #tpu.dot_dimension_numbers<[1], [0], [0], [1], [0, 0, 1, 1], [], []>} : vector<128x32xbf16>, vector<32x128xbf16>, vector<128x128xf32> -> vector<128x128xf32>
    %10 = arith.addf %4, %9 : vector<128x128xf32>
    %cst_12 = arith.constant 0.000000e+00 : f32
    %11 = vector.broadcast %cst_12 : f32 to vector<128x128xf32>
    %12 = arith.maximumf %10, %11 : vector<128x128xf32>
    %13 = arith.truncf %12 : vector<128x128xf32> to vector<128x128xbf16>
    %c0_13 = arith.constant 0 : index
    %c0_14 = arith.constant 0 : index
    %c0_15 = arith.constant 0 : index
    %14 = vector.load %arg6[%c0_13, %c0_14, %c0_15] : memref<1x128x128xbf16, #tpu.memory_space<vmem>>, vector<1x128x128xbf16>
    %15 = vector.shape_cast %14 : vector<1x128x128xbf16> to vector<128x128xbf16>
    %16 = vector.shape_cast %13 : vector<128x128xbf16> to vector<1x128x128xbf16>
    tpu.vector_store %arg6[%c0_13, %c0_14, %c0_15], %16 {strides = array<i32>} : memref<1x128x128xbf16, #tpu.memory_space<vmem>>, vector<1x128x128xbf16>,
    return
  }
  func.func @transform_0(%arg0: i32, %arg1: i32) -> (i32, i32, i32) {
    %c0_i32 = arith.constant 0 : i32
    %c0_i32_0 = arith.constant 0 : i32
    return %arg0, %arg1, %c0_i32 : i32, i32, i32
  }
  func.func @transform_1(%arg0: i32, %arg1: i32) -> (i32, i32, i32) {
    %c0_i32 = arith.constant 0 : i32
    %c0_i32_0 = arith.constant 0 : i32
    return %arg0, %arg1, %c0_i32 : i32, i32, i32
  }
  func.func @transform_2(%arg0: i32, %arg1: i32) -> (i32, i32, i32) {
    %c0_i32 = arith.constant 0 : i32
    %c0_i32_0 = arith.constant 0 : i32
    %c0_i32_1 = arith.constant 0 : i32
    return %arg0, %c0_i32, %c0_i32_0 : i32, i32, i32
  }
  func.func @transform_3(%arg0: i32, %arg1: i32) -> (i32, i32, i32) {
    %c0_i32 = arith.constant 0 : i32
    %c0_i32_0 = arith.constant 0 : i32
    %c0_i32_1 = arith.constant 0 : i32
    return %arg0, %c0_i32, %c0_i32_0 : i32, i32, i32
  }
  func.func @transform_4(%arg0: i32, %arg1: i32) -> (i32, i32, i32) {
    %c0_i32 = arith.constant 0 : i32
    %c0_i32_0 = arith.constant 0 : i32
    return %arg0, %arg1, %c0_i32 : i32, i32, i32
  }
}

module attributes {stable_mosaic.version = 11 : i64} {
  func.func @_fused_agg_kernel(%arg0: i32, %arg1: i32, %arg2: memref<1x64x32xbf16, #tpu.memory_space<vmem>>, %arg3: memref<1x64x32xbf16, #tpu.memory_space<vmem>>, %arg4: memref<1x32x128xbf16, #tpu.memory_space<vmem>>, %arg5: memref<1x32x128xbf16, #tpu.memory_space<vmem>>, %arg6: memref<1x64x128xbf16, #tpu.memory_space<vmem>>) attributes {dimension_semantics = [#tpu.dimension_semantics<parallel>, #tpu.dimension_semantics<parallel>], iteration_bounds = array<i64: 2, 1>, scalar_prefetch = 0 : i64, scratch_operands = 0 : i64, tpu.core_type = #tpu.core_type<tc>, window_params = [{transform_indices = @transform_0, window_bounds = array<i64: 1, 64, 32>}, {transform_indices = @transform_1, window_bounds = array<i64: 1, 64, 32>}, {transform_indices = @transform_2, window_bounds = array<i64: 1, 32, 128>}, {transform_indices = @transform_3, window_bounds = array<i64: 1, 32, 128>}, {transform_indices = @transform_4, window_bounds = array<i64: 1, 64, 128>}]} {
    %c0 = arith.constant 0 : index
    %c0_0 = arith.constant 0 : index
    %c0_1 = arith.constant 0 : index
    %0 = vector.load %arg2[%c0, %c0_0, %c0_1] : memref<1x64x32xbf16, #tpu.memory_space<vmem>>, vector<1x64x32xbf16>
    %1 = vector.shape_cast %0 : vector<1x64x32xbf16> to vector<64x32xbf16>
    %c0_2 = arith.constant 0 : index
    %c0_3 = arith.constant 0 : index
    %c0_4 = arith.constant 0 : index
    %2 = vector.load %arg4[%c0_2, %c0_3, %c0_4] : memref<1x32x128xbf16, #tpu.memory_space<vmem>>, vector<1x32x128xbf16>
    %3 = vector.shape_cast %2 : vector<1x32x128xbf16> to vector<32x128xbf16>
    %cst = arith.constant dense<0.000000e+00> : vector<64x128xf32>
    %4 = tpu.matmul %1, %3, %cst {dimension_numbers = #tpu.dot_dimension_numbers<[1], [0], [0], [1], [0, 0, 1, 1], [], []>} : vector<64x32xbf16>, vector<32x128xbf16>, vector<64x128xf32> -> vector<64x128xf32>
    %c0_5 = arith.constant 0 : index
    %c0_6 = arith.constant 0 : index
    %c0_7 = arith.constant 0 : index
    %5 = vector.load %arg3[%c0_5, %c0_6, %c0_7] : memref<1x64x32xbf16, #tpu.memory_space<vmem>>, vector<1x64x32xbf16>
    %6 = vector.shape_cast %5 : vector<1x64x32xbf16> to vector<64x32xbf16>
    %c0_8 = arith.constant 0 : index
    %c0_9 = arith.constant 0 : index
    %c0_10 = arith.constant 0 : index
    %7 = vector.load %arg5[%c0_8, %c0_9, %c0_10] : memref<1x32x128xbf16, #tpu.memory_space<vmem>>, vector<1x32x128xbf16>
    %8 = vector.shape_cast %7 : vector<1x32x128xbf16> to vector<32x128xbf16>
    %cst_11 = arith.constant dense<0.000000e+00> : vector<64x128xf32>
    %9 = tpu.matmul %6, %8, %cst_11 {dimension_numbers = #tpu.dot_dimension_numbers<[1], [0], [0], [1], [0, 0, 1, 1], [], []>} : vector<64x32xbf16>, vector<32x128xbf16>, vector<64x128xf32> -> vector<64x128xf32>
    %10 = arith.addf %4, %9 : vector<64x128xf32>
    %cst_12 = arith.constant 0.000000e+00 : f32
    %11 = vector.broadcast %cst_12 : f32 to vector<64x128xf32>
    %12 = arith.maximumf %10, %11 : vector<64x128xf32>
    %13 = arith.truncf %12 : vector<64x128xf32> to vector<64x128xbf16>
    %c0_13 = arith.constant 0 : index
    %c0_14 = arith.constant 0 : index
    %c0_15 = arith.constant 0 : index
    %14 = vector.load %arg6[%c0_13, %c0_14, %c0_15] : memref<1x64x128xbf16, #tpu.memory_space<vmem>>, vector<1x64x128xbf16>
    %15 = vector.shape_cast %14 : vector<1x64x128xbf16> to vector<64x128xbf16>
    %16 = vector.shape_cast %13 : vector<64x128xbf16> to vector<1x64x128xbf16>
    tpu.vector_store %arg6[%c0_13, %c0_14, %c0_15], %16 {strides = array<i32>} : memref<1x64x128xbf16, #tpu.memory_space<vmem>>, vector<1x64x128xbf16>,
    return
  }
  func.func @transform_0(%arg0: i32, %arg1: i32) -> (i32, i32, i32) {
    %c0_i32 = arith.constant 0 : i32
    %c0_i32_0 = arith.constant 0 : i32
    return %arg0, %arg1, %c0_i32 : i32, i32, i32
  }
  func.func @transform_1(%arg0: i32, %arg1: i32) -> (i32, i32, i32) {
    %c0_i32 = arith.constant 0 : i32
    %c0_i32_0 = arith.constant 0 : i32
    return %arg0, %arg1, %c0_i32 : i32, i32, i32
  }
  func.func @transform_2(%arg0: i32, %arg1: i32) -> (i32, i32, i32) {
    %c0_i32 = arith.constant 0 : i32
    %c0_i32_0 = arith.constant 0 : i32
    %c0_i32_1 = arith.constant 0 : i32
    return %arg0, %c0_i32, %c0_i32_0 : i32, i32, i32
  }
  func.func @transform_3(%arg0: i32, %arg1: i32) -> (i32, i32, i32) {
    %c0_i32 = arith.constant 0 : i32
    %c0_i32_0 = arith.constant 0 : i32
    %c0_i32_1 = arith.constant 0 : i32
    return %arg0, %c0_i32, %c0_i32_0 : i32, i32, i32
  }
  func.func @transform_4(%arg0: i32, %arg1: i32) -> (i32, i32, i32) {
    %c0_i32 = arith.constant 0 : i32
    %c0_i32_0 = arith.constant 0 : i32
    return %arg0, %arg1, %c0_i32 : i32, i32, i32
  }
}

</mosaic_0001>

<llo_original>
// kernel: bipartite_gcn_forward.3
$region0: #{bipartite_gcn_forward.3}
  #allocation0 [shape = 'u32[]', space=smem, size = 0x4, offset = 0x4, fixed_abs, tag = 'smem constant byte address 0x4 - core index']
  #allocation1 [shape = 'u32[72,128]{1,0:T(1,128)}', space=vmem, size = 0x9000, scoped, tag = 'internal scratch']
  %s0 = inlined_call_operand.vmem [shape: bf16[2,128,32], index: 0, kind: input, shape index: {}]
  %s1 = inlined_call_operand.vmem [shape: bf16[2,128,32], index: 1, kind: input, shape index: {}]
  %s2 = inlined_call_operand.vmem [shape: bf16[2,32,128], index: 2, kind: input, shape index: {}]
  %s3 = inlined_call_operand.vmem [shape: bf16[2,32,128], index: 3, kind: input, shape index: {}]
  %s4 = inlined_call_operand.vmem [shape: bf16[2,128,128], index: 4, kind: output, shape index: {}]
  %s5 = sld [smem:[#allocation0]]
  $region49: #{bipartite_gcn_forward.3} parent=0
    _
  %s7 = ssub.s32 1, %s5
  %s8 = scalar_select 0, %s7, %s5
  loop: start=0, step=1, limit=4
  $region2: #{bipartite_gcn_forward.3} parent=0 // loop_pre_header
    _
  $region3: #{bipartite_gcn_forward.3} parent=0 // loop_header
    %s10 = sphi 0, %s14
    %p11 = scmp.ge.s32.totalorder %s10, 4
    %s17 = sphi 0, %s29
    %s18 = sphi 0, %s25
    %s19 = sphi 0, %s17
    %s20 = sphi 0, %s18
    %s21 = sphi 0, %s19
    %s22 = sphi 0, %s20
    %s34 = sphi 0, %s36
    %s37 = sphi 0, %s34
    %s38 = sphi 0, %s37
    %s54 = sphi 0, %s38
    %s62 = sphi 0, %s64
    %s65 = sphi 0, %s62
    %s66 = sphi 0, %s65
    %s82 = sphi 0, %s66
    %s88 = sphi 0, %s90
    %s91 = sphi 0, %s88
    %s92 = sphi 0, %s91
    %s108 = sphi 0, %s92
    %s114 = sphi 0, %s116
    %s117 = sphi 0, %s114
    %s118 = sphi 0, %s117
    %s134 = sphi 0, %s118
    %s142 = sphi 0, %s144
    %s145 = sphi 0, %s142
    %s146 = sphi 0, %s145
    %s162 = sphi 0, %s146
  $region4: #{bipartite_gcn_forward.3} parent=0 // loop_header_branch
    %13 = sbr.rel (%p11) target = $region8
  $region5: #{bipartite_gcn_forward.3} parent=0 // loop_body
    %s15 = ssub.s32 %s10, 1
    %s16 = ssub.s32 %s10, 2
    %s23 = sadd.s32 1, %s18
    %p24 = scmp.ge.s32.totalorder %s23, 1
    %s25 = scalar_select %p24, 0, %s23
    %s26 = sadd.s32 1, %s17
    %s27 = scalar_select %p24, %s26, %s17
    %p28 = scmp.ge.s32.totalorder %s27, 2
    %s29 = scalar_select %p28, 0, %s27
    %s30 = ssub.s32 %s17, %s29
    %s31 = ssub.s32 %s18, %s25
    %s32 = sor.u32 %s30, %s31
    %p33 = scmp.eq.s32.totalorder %s32, 0
    %s35 = sadd.s32 %s34, 1
    %s36 = scalar_select %p33, %s34, %s35
    %p39 = pneg %p33
    %p40 = scmp.eq.s32.totalorder %s10, 1
    %p41 = por %p39, %p40
    %p42 = scmp.ne.s32.totalorder %s34, %s37
    %p43 = scmp.eq.s32.totalorder %s10, 0
    %p44 = por %p42, %p43
    %p45 = scmp.ne.s32.totalorder %s34, %s37
    %p46 = scmp.eq.s32.totalorder %s15, 1
    %p47 = por %p45, %p46
    %p48 = scmp.ne.s32.totalorder %s37, %s38
    %p49 = scmp.eq.s32.totalorder %s15, 0
    %p50 = por %p48, %p49
    %p51 = scmp.ne.s32.totalorder %s37, %s38
    %p52 = scmp.eq.s32.totalorder %s16, 1
    %p53 = por %p51, %p52
    %p55 = scmp.ne.s32.totalorder %s38, %s54
    %p56 = scmp.eq.s32.totalorder %s16, 0
    %p57 = por %p55, %p56
    %s58 = ssub.s32 %s17, %s29
    %s59 = ssub.s32 %s18, %s25
    %s60 = sor.u32 %s58, %s59
    %p61 = scmp.eq.s32.totalorder %s60, 0
    %s63 = sadd.s32 %s62, 1
    %s64 = scalar_select %p61, %s62, %s63
    %p67 = pneg %p61
    %p68 = scmp.eq.s32.totalorder %s10, 1
    %p69 = por %p67, %p68
    %p70 = scmp.ne.s32.totalorder %s62, %s65
    %p71 = scmp.eq.s32.totalorder %s10, 0
    %p72 = por %p70, %p71
    %p73 = scmp.ne.s32.totalorder %s62, %s65
    %p74 = scmp.eq.s32.totalorder %s15, 1
    %p75 = por %p73, %p74
    %p76 = scmp.ne.s32.totalorder %s65, %s66
    %p77 = scmp.eq.s32.totalorder %s15, 0
    %p78 = por %p76, %p77
    %p79 = scmp.ne.s32.totalorder %s65, %s66
    %p80 = scmp.eq.s32.totalorder %s16, 1
    %p81 = por %p79, %p80
    %p83 = scmp.ne.s32.totalorder %s66, %s82
    %p84 = scmp.eq.s32.totalorder %s16, 0
    %p85 = por %p83, %p84
    %s86 = ssub.s32 %s17, %s29
    %p87 = scmp.eq.s32.totalorder %s86, 0
    %s89 = sadd.s32 %s88, 1
    %s90 = scalar_select %p87, %s88, %s89
    %p93 = pneg %p87
    %p94 = scmp.eq.s32.totalorder %s10, 1
    %p95 = por %p93, %p94
    %p96 = scmp.ne.s32.totalorder %s88, %s91
    %p97 = scmp.eq.s32.totalorder %s10, 0
    %p98 = por %p96, %p97
    %p99 = scmp.ne.s32.totalorder %s88, %s91
    %p100 = scmp.eq.s32.totalorder %s15, 1
    %p101 = por %p99, %p100
    %p102 = scmp.ne.s32.totalorder %s91, %s92
    %p103 = scmp.eq.s32.totalorder %s15, 0
    %p104 = por %p102, %p103
    %p105 = scmp.ne.s32.totalorder %s91, %s92
    %p106 = scmp.eq.s32.totalorder %s16, 1
    %p107 = por %p105, %p106
    %p109 = scmp.ne.s32.totalorder %s92, %s108
    %p110 = scmp.eq.s32.totalorder %s16, 0
    %p111 = por %p109, %p110
    %s112 = ssub.s32 %s17, %s29
    %p113 = scmp.eq.s32.totalorder %s112, 0
    %s115 = sadd.s32 %s114, 1
    %s116 = scalar_select %p113, %s114, %s115
    %p119 = pneg %p113
    %p120 = scmp.eq.s32.totalorder %s10, 1
    %p121 = por %p119, %p120
    %p122 = scmp.ne.s32.totalorder %s114, %s117
    %p123 = scmp.eq.s32.totalorder %s10, 0
    %p124 = por %p122, %p123
    %p125 = scmp.ne.s32.totalorder %s114, %s117
    %p126 = scmp.eq.s32.totalorder %s15, 1
    %p127 = por %p125, %p126
    %p128 = scmp.ne.s32.totalorder %s117, %s118
    %p129 = scmp.eq.s32.totalorder %s15, 0
    %p130 = por %p128, %p129
    %p131 = scmp.ne.s32.totalorder %s117, %s118
    %p132 = scmp.eq.s32.totalorder %s16, 1
    %p133 = por %p131, %p132
    %p135 = scmp.ne.s32.totalorder %s118, %s134
    %p136 = scmp.eq.s32.totalorder %s16, 0
    %p137 = por %p135, %p136
    %s138 = ssub.s32 %s17, %s29
    %s139 = ssub.s32 %s18, %s25
    %s140 = sor.u32 %s138, %s139
    %p141 = scmp.eq.s32.totalorder %s140, 0
    %s143 = sadd.s32 %s142, 1
    %s144 = scalar_select %p141, %s142, %s143
    %p147 = pneg %p141
    %p148 = scmp.eq.s32.totalorder %s10, 1
    %p149 = por %p147, %p148
    %p150 = scmp.ne.s32.totalorder %s142, %s145
    %p151 = scmp.eq.s32.totalorder %s10, 0
    %p152 = por %p150, %p151
    %p153 = scmp.ne.s32.totalorder %s142, %s145
    %p154 = scmp.eq.s32.totalorder %s15, 1
    %p155 = por %p153, %p154
    %p156 = scmp.ne.s32.totalorder %s145, %s146
    %p157 = scmp.eq.s32.totalorder %s15, 0
    %p158 = por %p156, %p157
    %p159 = scmp.ne.s32.totalorder %s145, %s146
    %p160 = scmp.eq.s32.totalorder %s16, 1
    %p161 = por %p159, %p160
    %p163 = scmp.ne.s32.totalorder %s146, %s162
    %p164 = scmp.eq.s32.totalorder %s16, 0
    %p165 = por %p163, %p164
    %p166 = scmp.le.s32.totalorder 1, %s10
    %p167 = scmp.lt.s32.totalorder %s10, 3
    %p168 = pnand %p166, %p167
    %p169 = pneg %p168
    // Predicated region
    $region9: #{bipartite_gcn_forward.3} parent=5 // pred_check
      _
    $region10: #{bipartite_gcn_forward.3} parent=5 // pred_check_branch
      %171 = sbr.rel (%p168) target = $region12
    $region11: #{bipartite_gcn_forward.3} parent=5 // pred_region
      %s172 = ssub.s32 %s10, 1
    $region12: #{bipartite_gcn_forward.3} parent=5 // pred_fallthru
      _
    %p173 = scmp.lt.s32.totalorder %s10, 2
    // Predicated region
    $region13: #{bipartite_gcn_forward.3} parent=5 // pred_check
      %p174 = pneg %p173
    $region14: #{bipartite_gcn_forward.3} parent=5 // pred_check_branch
      %176 = sbr.rel (%p174) target = $region16
    $region15: #{bipartite_gcn_forward.3} parent=5 // pred_region
      // Predicated region
      $region17: #{bipartite_gcn_forward.3} parent=15 // pred_check
        %p177 = pneg %p44
      $region18: #{bipartite_gcn_forward.3} parent=15 // pred_check_branch
        %179 = sbr.rel (%p177) target = $region20
      $region19: #{bipartite_gcn_forward.3} parent=15 // pred_region
        %s180 = smul.u32 16, %s18
        %p181 = scmp.lt.s32.totalorder %s17, 1
        %s182 = scalar_select %p181, %s17, 1
        %p183 = scmp.lt.s32.totalorder %s180, 15
        %s184 = scalar_select %p183, %s180, 15
        %s185 = smul.addr %s182, 16
        %s186 = sadd.s32 %s184, %s185
        %s187 = smul.addr %s186, 4
        %s188 = scalar_lea.vmem %s0, %s187
        %s189 = smul.u32 16, %s18
      $region20: #{bipartite_gcn_forward.3} parent=15 // pred_fallthru
        _
      // Predicated region
      $region21: #{bipartite_gcn_forward.3} parent=15 // pred_check
        %p190 = pneg %p72
      $region22: #{bipartite_gcn_forward.3} parent=15 // pred_check_branch
        %192 = sbr.rel (%p190) target = $region24
      $region23: #{bipartite_gcn_forward.3} parent=15 // pred_region
        %s193 = smul.u32 16, %s18
        %p194 = scmp.lt.s32.totalorder %s17, 1
        %s195 = scalar_select %p194, %s17, 1
        %p196 = scmp.lt.s32.totalorder %s193, 15
        %s197 = scalar_select %p196, %s193, 15
        %s198 = smul.addr %s195, 16
        %s199 = sadd.s32 %s197, %s198
        %s200 = smul.addr %s199, 4
        %s201 = scalar_lea.vmem %s1, %s200
        %s202 = smul.u32 16, %s18
      $region24: #{bipartite_gcn_forward.3} parent=15 // pred_fallthru
        _
      // Predicated region
      $region25: #{bipartite_gcn_forward.3} parent=15 // pred_check
        %p203 = pneg %p98
      $region26: #{bipartite_gcn_forward.3} parent=15 // pred_check_branch
        %205 = sbr.rel (%p203) target = $region28
      $region27: #{bipartite_gcn_forward.3} parent=15 // pred_region
        %p206 = scmp.lt.s32.totalorder %s17, 1
        %s207 = scalar_select %p206, %s17, 1
        %s208 = smul.addr %s207, 4
        %s209 = smul.addr %s208, 4
        %s210 = scalar_lea.vmem %s2, %s209
      $region28: #{bipartite_gcn_forward.3} parent=15 // pred_fallthru
        _
      // Predicated region
      $region29: #{bipartite_gcn_forward.3} parent=15 // pred_check
        %p211 = pneg %p124
      $region30: #{bipartite_gcn_forward.3} parent=15 // pred_check_branch
        %213 = sbr.rel (%p211) target = $region32
      $region31: #{bipartite_gcn_forward.3} parent=15 // pred_region
        %p214 = scmp.lt.s32.totalorder %s17, 1
        %s215 = scalar_select %p214, %s17, 1
        %s216 = smul.addr %s215, 4
        %s217 = smul.addr %s216, 4
        %s218 = scalar_lea.vmem %s3, %s217
      $region32: #{bipartite_gcn_forward.3} parent=15 // pred_fallthru
        _
    $region16: #{bipartite_gcn_forward.3} parent=5 // pred_fallthru
      _
    %p219 = scmp.le.s32.totalorder 1, %s10
    %p220 = scmp.lt.s32.totalorder %s10, 3
    %p221 = pnand %p219, %p220
    %p222 = pneg %p221
    // Predicated region
    $region33: #{bipartite_gcn_forward.3} parent=5 // pred_check
      _
    $region34: #{bipartite_gcn_forward.3} parent=5 // pred_check_branch
      %224 = sbr.rel (%p221) target = $region36
    $region35: #{bipartite_gcn_forward.3} parent=5 // pred_region
      %s225 = ssub.s32 %s10, 1
      %s226 = smul.u32 16, %s20
      %p227 = scmp.lt.s32.totalorder %s19, 1
      %s228 = scalar_select %p227, %s19, 1
      %p229 = scmp.lt.s32.totalorder %s226, 15
      %s230 = scalar_select %p229, %s226, 15
      %s231 = smul.addr %s228, 16
      %s232 = sadd.s32 %s230, %s231
      %s233 = smul.addr %s232, 4
      %s234 = scalar_lea.vmem %s0, %s233
      %p235 = pneg %p50
      %p236 = pneg %p47
      %s237 = smul.u32 16, %s20
      %p238 = scmp.lt.s32.totalorder %s19, 1
      %s239 = scalar_select %p238, %s19, 1
      %p240 = scmp.lt.s32.totalorder %s237, 15
      %s241 = scalar_select %p240, %s237, 15
      %s242 = smul.addr %s239, 16
      %s243 = sadd.s32 %s241, %s242
      %s244 = smul.addr %s243, 4
      %s245 = scalar_lea.vmem %s1, %s244
      %p246 = pneg %p78
      %p247 = pneg %p75
      %p248 = scmp.lt.s32.totalorder %s19, 1
      %s249 = scalar_select %p248, %s19, 1
      %s250 = smul.addr %s249, 4
      %s251 = smul.addr %s250, 4
      %s252 = scalar_lea.vmem %s2, %s251
      %p253 = pneg %p104
      %p254 = pneg %p101
      %p255 = scmp.lt.s32.totalorder %s19, 1
      %s256 = scalar_select %p255, %s19, 1
      %s257 = smul.addr %s256, 4
      %s258 = smul.addr %s257, 4
      %s259 = scalar_lea.vmem %s3, %s258
      %p260 = pneg %p130
      %p261 = pneg %p127
      %p262 = pneg %p158
      %p263 = pneg %p155
      %s264 = smul.u32 16, %s20
      %p265 = scmp.lt.s32.totalorder %s19, 1
      %s266 = scalar_select %p265, %s19, 1
      %p267 = scmp.lt.s32.totalorder %s264, 15
      %s268 = scalar_select %p267, %s264, 15
      %s269 = smul.addr %s266, 16
      %s270 = sadd.s32 %s268, %s269
      %s271 = smul.addr %s270, 4
      %s272 = scalar_lea.vmem %s4, %s271
      %s273 = smul.u32 16, %s20
      %p274 = scmp.lt.s32.totalorder %s19, 1
      %s275 = scalar_select %p274, %s19, 1
      %p276 = scmp.lt.s32.totalorder %s273, 15
      %s277 = scalar_select %p276, %s273, 15
      %s278 = smul.addr %s275, 16
      %s279 = sadd.s32 %s277, %s278
      %s280 = smul.addr %s279, 4
      %s281 = scalar_lea.vmem %s0, %s280
      %s282 = smul.u32 16, %s20
      %s283 = smul.u32 16, %s20
      %p284 = scmp.lt.s32.totalorder %s19, 1
      %s285 = scalar_select %p284, %s19, 1
      %p286 = scmp.lt.s32.totalorder %s283, 15
      %s287 = scalar_select %p286, %s283, 15
      %s288 = smul.addr %s285, 16
      %s289 = sadd.s32 %s287, %s288
      %s290 = smul.addr %s289, 4
      %s291 = scalar_lea.vmem %s1, %s290
      %s292 = smul.u32 16, %s20
      %p293 = scmp.lt.s32.totalorder %s19, 1
      %s294 = scalar_select %p293, %s19, 1
      %s295 = smul.addr %s294, 4
      %s296 = smul.addr %s295, 4
      %s297 = scalar_lea.vmem %s2, %s296
      %p298 = scmp.lt.s32.totalorder %s19, 1
      %s299 = scalar_select %p298, %s19, 1
      %s300 = smul.addr %s299, 4
      %s301 = smul.addr %s300, 4
      %s302 = scalar_lea.vmem %s3, %s301
      %s303 = smul.u32 16, %s20
      %p304 = scmp.lt.s32.totalorder %s19, 1
      %s305 = scalar_select %p304, %s19, 1
      %p306 = scmp.lt.s32.totalorder %s303, 15
      %s307 = scalar_select %p306, %s303, 15
      %s308 = smul.addr %s305, 16
      %s309 = sadd.s32 %s307, %s308
      %s310 = smul.addr %s309, 4
      %s311 = scalar_lea.vmem %s4, %s310
      %s312 = smul.u32 16, %s20
      %v314 = vld [vmem:[%s281] sm:$0xf]
      %v315 = vld [vmem:[%s281 + $0x4] sm:$0xf]
      %v316 = vld [vmem:[%s281 + $0x8] sm:$0xf]
      %v317 = vld [vmem:[%s281 + $0xc] sm:$0xf]
      %v318 = vld [vmem:[%s281 + $0x10] sm:$0xf]
      %v319 = vld [vmem:[%s281 + $0x14] sm:$0xf]
      %v320 = vld [vmem:[%s281 + $0x18] sm:$0xf]
      %v321 = vld [vmem:[%s281 + $0x1c] sm:$0xf]
      %v322 = vld [vmem:[%s281 + $0x20] sm:$0xf]
      %v323 = vld [vmem:[%s281 + $0x24] sm:$0xf]
      %v324 = vld [vmem:[%s281 + $0x28] sm:$0xf]
      %v325 = vld [vmem:[%s281 + $0x2c] sm:$0xf]
      %v326 = vld [vmem:[%s281 + $0x30] sm:$0xf]
      %v327 = vld [vmem:[%s281 + $0x34] sm:$0xf]
      %v328 = vld [vmem:[%s281 + $0x38] sm:$0xf]
      %v329 = vld [vmem:[%s281 + $0x3c] sm:$0xf]
      %v330 = vld [vmem:[%s297] sm:$0xf]
      %v331 = vld [vmem:[%s297 + $0x4] sm:$0xf]
      %v332 = vld [vmem:[%s297 + $0x8] sm:$0xf]
      %v333 = vld [vmem:[%s297 + $0xc] sm:$0xf]
      %v334 = vld [vmem:[%s291] sm:$0xf]
      %v335 = vld [vmem:[%s291 + $0x4] sm:$0xf]
      %v336 = vld [vmem:[%s291 + $0x8] sm:$0xf]
      %v337 = vld [vmem:[%s291 + $0xc] sm:$0xf]
      %v338 = vld [vmem:[%s291 + $0x10] sm:$0xf]
      %v339 = vld [vmem:[%s291 + $0x14] sm:$0xf]
      %v340 = vld [vmem:[%s291 + $0x18] sm:$0xf]
      %v341 = vld [vmem:[%s291 + $0x1c] sm:$0xf]
      %v342 = vld [vmem:[%s291 + $0x20] sm:$0xf]
      %v343 = vld [vmem:[%s291 + $0x24] sm:$0xf]
      %v344 = vld [vmem:[%s291 + $0x28] sm:$0xf]
      %v345 = vld [vmem:[%s291 + $0x2c] sm:$0xf]
      %v346 = vld [vmem:[%s291 + $0x30] sm:$0xf]
      %v347 = vld [vmem:[%s291 + $0x34] sm:$0xf]
      %v348 = vld [vmem:[%s291 + $0x38] sm:$0xf]
      %v349 = vld [vmem:[%s291 + $0x3c] sm:$0xf]
      %v350 = vld [vmem:[%s302] sm:$0xf]
      %v351 = vld [vmem:[%s302 + $0x4] sm:$0xf]
      %v352 = vld [vmem:[%s302 + $0x8] sm:$0xf]
      %v353 = vld [vmem:[%s302 + $0xc] sm:$0xf]
      %v370 = vunpack.c.l.b16 %v334
      %v371 = vunpack.c.l.b16 %v335
      %v372 = vunpack.c.l.b16 %v336
      %v373 = vunpack.c.l.b16 %v337
      %v374 = vunpack.c.l.b16 %v338
      %v375 = vunpack.c.l.b16 %v339
      %v376 = vunpack.c.l.b16 %v340
      %v377 = vunpack.c.l.b16 %v341
      %v378 = vunpack.c.l.b16 %v342
      %v379 = vunpack.c.l.b16 %v343
      %v380 = vunpack.c.l.b16 %v344
      %v381 = vunpack.c.l.b16 %v345
      %v382 = vunpack.c.l.b16 %v346
      %v383 = vunpack.c.l.b16 %v347
      %v384 = vunpack.c.l.b16 %v348
      %v385 = vunpack.c.l.b16 %v349
      %v386 = vpack.c.b16 %v371, %v370
      %v387 = vpack.c.b16 %v373, %v372
      %v388 = vpack.c.b16 %v375, %v374
      %v389 = vpack.c.b16 %v377, %v376
      %v390 = vpack.c.b16 %v379, %v378
      %v391 = vpack.c.b16 %v381, %v380
      %v392 = vpack.c.b16 %v383, %v382
      %v393 = vpack.c.b16 %v385, %v384
      %v398 = vunpack.c.l.b16 %v350
      %v399 = vunpack.c.l.b16 %v351
      %v400 = vunpack.c.l.b16 %v352
      %v401 = vunpack.c.l.b16 %v353
      %v402 = vpack.c.b16 %v399, %v398
      %v403 = vpack.c.b16 %v401, %v400
      %vm406 = vcmask 261120
      %v408 = vsel %vm406, %v386, 0
      %v411 = vsel %vm406, %v387, 0
      %v414 = vsel %vm406, %v388, 0
      %v417 = vsel %vm406, %v389, 0
      %v420 = vsel %vm406, %v390, 0
      %v423 = vsel %vm406, %v391, 0
      %v426 = vsel %vm406, %v392, 0
      %v429 = vsel %vm406, %v393, 0
      %431 = vmatpush.bf16.msra.mxu0 0
      %432 = vmatpush.bf16.msra.mxu0 0
      %433 = vmatpush.bf16.msra.mxu0 0
      %434 = vmatpush.bf16.msra.mxu0 0
      %435 = vmatpush.bf16.msra.mxu0 0
      %436 = vmatpush.bf16.msra.mxu0 0
      %437 = vmatpush.bf16.msra.mxu0 %v403
      %438 = vmatpush.bf16.msra.mxu0 %v402
      %439 = vmatmul.bf16.gmra.mxu0 %v408
      %v440 = vpop.f32.mrf.mxu0
      %v441 = vadd.f32 0.0, %v440
      %v442 = vpop.f32.mrf.mxu0
      %v443 = vadd.f32 0.0, %v442
      %444 = vmatmul.bf16.gmra.mxu0 %v411
      %v445 = vpop.f32.mrf.mxu0
      %v446 = vadd.f32 0.0, %v445
      %v447 = vpop.f32.mrf.mxu0
      %v448 = vadd.f32 0.0, %v447
      %449 = vmatmul.bf16.gmra.mxu0 %v414
      %v450 = vpop.f32.mrf.mxu0
      %v451 = vadd.f32 0.0, %v450
      %v452 = vpop.f32.mrf.mxu0
      %v453 = vadd.f32 0.0, %v452
      %454 = vmatmul.bf16.gmra.mxu0 %v417
      %v455 = vpop.f32.mrf.mxu0
      %v456 = vadd.f32 0.0, %v455
      %v457 = vpop.f32.mrf.mxu0
      %v458 = vadd.f32 0.0, %v457
      %459 = vmatmul.bf16.gmra.mxu0 %v420
      %v460 = vpop.f32.mrf.mxu0
      %v461 = vadd.f32 0.0, %v460
      %v462 = vpop.f32.mrf.mxu0
      %v463 = vadd.f32 0.0, %v462
      %464 = vmatmul.bf16.gmra.mxu0 %v423
      %v465 = vpop.f32.mrf.mxu0
      %v466 = vadd.f32 0.0, %v465
      %v467 = vpop.f32.mrf.mxu0
      %v468 = vadd.f32 0.0, %v467
      %469 = vmatmul.bf16.gmra.mxu0 %v426
      %v470 = vpop.f32.mrf.mxu0
      %v471 = vadd.f32 0.0, %v470
      %v472 = vpop.f32.mrf.mxu0
      %v473 = vadd.f32 0.0, %v472
      %474 = vmatmul.bf16.gmra.mxu0 %v429
      %v475 = vpop.f32.mrf.mxu0
      %v476 = vadd.f32 0.0, %v475
      %v477 = vpop.f32.mrf.mxu0
      %v478 = vadd.f32 0.0, %v477
      %479 = vdwg.mxu0
      %v496 = vunpack.c.l.b16 %v314
      %v497 = vunpack.c.l.b16 %v315
      %v498 = vunpack.c.l.b16 %v316
      %v499 = vunpack.c.l.b16 %v317
      %v500 = vunpack.c.l.b16 %v318
      %v501 = vunpack.c.l.b16 %v319
      %v502 = vunpack.c.l.b16 %v320
      %v503 = vunpack.c.l.b16 %v321
      %v504 = vunpack.c.l.b16 %v322
      %v505 = vunpack.c.l.b16 %v323
      %v506 = vunpack.c.l.b16 %v324
      %v507 = vunpack.c.l.b16 %v325
      %v508 = vunpack.c.l.b16 %v326
      %v509 = vunpack.c.l.b16 %v327
      %v510 = vunpack.c.l.b16 %v328
      %v511 = vunpack.c.l.b16 %v329
      %v512 = vpack.c.b16 %v497, %v496
      %v513 = vpack.c.b16 %v499, %v498
      %v514 = vpack.c.b16 %v501, %v500
      %v515 = vpack.c.b16 %v503, %v502
      %v516 = vpack.c.b16 %v505, %v504
      %v517 = vpack.c.b16 %v507, %v506
      %v518 = vpack.c.b16 %v509, %v508
      %v519 = vpack.c.b16 %v511, %v510
      %v524 = vunpack.c.l.b16 %v330
      %v525 = vunpack.c.l.b16 %v331
      %v526 = vunpack.c.l.b16 %v332
      %v527 = vunpack.c.l.b16 %v333
      %v528 = vpack.c.b16 %v525, %v524
      %v529 = vpack.c.b16 %v527, %v526
      %v533 = vsel %vm406, %v512, 0
      %v536 = vsel %vm406, %v513, 0
      %v539 = vsel %vm406, %v514, 0
      %v542 = vsel %vm406, %v515, 0
      %v545 = vsel %vm406, %v516, 0
      %v548 = vsel %vm406, %v517, 0
      %v551 = vsel %vm406, %v518, 0
      %v554 = vsel %vm406, %v519, 0
      %556 = vmatpush.bf16.msra.mxu0 0
      %557 = vmatpush.bf16.msra.mxu0 0
      %558 = vmatpush.bf16.msra.mxu0 0
      %559 = vmatpush.bf16.msra.mxu0 0
      %560 = vmatpush.bf16.msra.mxu0 0
      %561 = vmatpush.bf16.msra.mxu0 0
      %562 = vmatpush.bf16.msra.mxu0 %v529
      %563 = vmatpush.bf16.msra.mxu0 %v528
      %564 = vmatmul.bf16.gmra.mxu0 %v533
      %v565 = vpop.f32.mrf.mxu0
      %v566 = vadd.f32 %v441, %v565
      %v567 = vpop.f32.mrf.mxu0
      %v568 = vadd.f32 %v443, %v567
      %569 = vmatmul.bf16.gmra.mxu0 %v536
      %v570 = vpop.f32.mrf.mxu0
      %v571 = vadd.f32 %v446, %v570
      %v572 = vpop.f32.mrf.mxu0
      %v573 = vadd.f32 %v448, %v572
      %574 = vmatmul.bf16.gmra.mxu0 %v539
      %v575 = vpop.f32.mrf.mxu0
      %v576 = vadd.f32 %v451, %v575
      %v577 = vpop.f32.mrf.mxu0
      %v578 = vadd.f32 %v453, %v577
      %579 = vmatmul.bf16.gmra.mxu0 %v542
      %v580 = vpop.f32.mrf.mxu0
      %v581 = vadd.f32 %v456, %v580
      %v582 = vpop.f32.mrf.mxu0
      %v583 = vadd.f32 %v458, %v582
      %584 = vmatmul.bf16.gmra.mxu0 %v545
      %v585 = vpop.f32.mrf.mxu0
      %v586 = vadd.f32 %v461, %v585
      %v587 = vpop.f32.mrf.mxu0
      %v588 = vadd.f32 %v463, %v587
      %589 = vmatmul.bf16.gmra.mxu0 %v548
      %v590 = vpop.f32.mrf.mxu0
      %v591 = vadd.f32 %v466, %v590
      %v592 = vpop.f32.mrf.mxu0
      %v593 = vadd.f32 %v468, %v592
      %594 = vmatmul.bf16.gmra.mxu0 %v551
      %v595 = vpop.f32.mrf.mxu0
      %v596 = vadd.f32 %v471, %v595
      %v597 = vpop.f32.mrf.mxu0
      %v598 = vadd.f32 %v473, %v597
      %599 = vmatmul.bf16.gmra.mxu0 %v554
      %v600 = vpop.f32.mrf.mxu0
      %v601 = vadd.f32 %v476, %v600
      %v602 = vpop.f32.mrf.mxu0
      %v603 = vadd.f32 %v478, %v602
      %604 = vdwg.mxu0
      %v605 = vmax.f32 %v566, 0.0
      %v606 = vmax.f32 %v568, 0.0
      %v607 = vmax.f32 %v571, 0.0
      %v608 = vmax.f32 %v573, 0.0
      %v609 = vmax.f32 %v576, 0.0
      %v610 = vmax.f32 %v578, 0.0
      %v611 = vmax.f32 %v581, 0.0
      %v612 = vmax.f32 %v583, 0.0
      %v613 = vmax.f32 %v586, 0.0
      %v614 = vmax.f32 %v588, 0.0
      %v615 = vmax.f32 %v591, 0.0
      %v616 = vmax.f32 %v593, 0.0
      %v617 = vmax.f32 %v596, 0.0
      %v618 = vmax.f32 %v598, 0.0
      %v619 = vmax.f32 %v601, 0.0
      %v620 = vmax.f32 %v603, 0.0
      %v621 = vpack.c.bf16 %v605, %v605
      %v622 = vpack.c.bf16 %v606, %v606
      %v623 = vpack.c.bf16 %v607, %v607
      %v624 = vpack.c.bf16 %v608, %v608
      %v625 = vpack.c.bf16 %v609, %v609
      %v626 = vpack.c.bf16 %v610, %v610
      %v627 = vpack.c.bf16 %v611, %v611
      %v628 = vpack.c.bf16 %v612, %v612
      %v629 = vpack.c.bf16 %v613, %v613
      %v630 = vpack.c.bf16 %v614, %v614
      %v631 = vpack.c.bf16 %v615, %v615
      %v632 = vpack.c.bf16 %v616, %v616
      %v633 = vpack.c.bf16 %v617, %v617
      %v634 = vpack.c.bf16 %v618, %v618
      %v635 = vpack.c.bf16 %v619, %v619
      %v636 = vpack.c.bf16 %v620, %v620
      %637 = vst [vmem:[%s311] sm:$0xf] %v621
      %638 = vst [vmem:[%s311 + $0x4] sm:$0xf] %v622
      %639 = vst [vmem:[%s311 + $0x8] sm:$0xf] %v623
      %640 = vst [vmem:[%s311 + $0xc] sm:$0xf] %v624
      %641 = vst [vmem:[%s311 + $0x10] sm:$0xf] %v625
      %642 = vst [vmem:[%s311 + $0x14] sm:$0xf] %v626
      %643 = vst [vmem:[%s311 + $0x18] sm:$0xf] %v627
      %644 = vst [vmem:[%s311 + $0x1c] sm:$0xf] %v628
      %645 = vst [vmem:[%s311 + $0x20] sm:$0xf] %v629
      %646 = vst [vmem:[%s311 + $0x24] sm:$0xf] %v630
      %647 = vst [vmem:[%s311 + $0x28] sm:$0xf] %v631
      %648 = vst [vmem:[%s311 + $0x2c] sm:$0xf] %v632
      %649 = vst [vmem:[%s311 + $0x30] sm:$0xf] %v633
      %650 = vst [vmem:[%s311 + $0x34] sm:$0xf] %v634
      %651 = vst [vmem:[%s311 + $0x38] sm:$0xf] %v635
      %652 = vst [vmem:[%s311 + $0x3c] sm:$0xf] %v636
      %s653 = smul.u32 16, %s20
      %p654 = scmp.lt.s32.totalorder %s19, 1
      %s655 = scalar_select %p654, %s19, 1
      %p656 = scmp.lt.s32.totalorder %s653, 15
      %s657 = scalar_select %p656, %s653, 15
      %s658 = smul.addr %s655, 16
      %s659 = sadd.s32 %s657, %s658
      %s660 = smul.addr %s659, 4
      %s661 = scalar_lea.vmem %s4, %s660
      // Predicated region
      $region37: #{bipartite_gcn_forward.3} parent=35 // pred_check
        %p662 = pneg %p155
      $region38: #{bipartite_gcn_forward.3} parent=35 // pred_check_branch
        %664 = sbr.rel (%p662) target = $region40
      $region39: #{bipartite_gcn_forward.3} parent=35 // pred_region
        %s665 = smul.u32 16, %s20
      $region40: #{bipartite_gcn_forward.3} parent=35 // pred_fallthru
        _
    $region36: #{bipartite_gcn_forward.3} parent=5 // pred_fallthru
      _
    %p666 = scmp.le.s32.totalorder 2, %s10
    // Predicated region
    $region41: #{bipartite_gcn_forward.3} parent=5 // pred_check
      %p667 = pneg %p666
    $region42: #{bipartite_gcn_forward.3} parent=5 // pred_check_branch
      %669 = sbr.rel (%p667) target = $region44
    $region43: #{bipartite_gcn_forward.3} parent=5 // pred_region
      %s670 = ssub.s32 %s10, 2
      // Predicated region
      $region45: #{bipartite_gcn_forward.3} parent=43 // pred_check
        %p671 = pneg %p161
      $region46: #{bipartite_gcn_forward.3} parent=43 // pred_check_branch
        %673 = sbr.rel (%p671) target = $region48
      $region47: #{bipartite_gcn_forward.3} parent=43 // pred_region
        %s674 = smul.u32 16, %s22
        %p675 = scmp.lt.s32.totalorder %s21, 1
        %s676 = scalar_select %p675, %s21, 1
        %p677 = scmp.lt.s32.totalorder %s674, 15
        %s678 = scalar_select %p677, %s674, 15
        %s679 = smul.addr %s676, 16
        %s680 = sadd.s32 %s678, %s679
        %s681 = smul.addr %s680, 4
        %s682 = scalar_lea.vmem %s4, %s681
      $region48: #{bipartite_gcn_forward.3} parent=43 // pred_fallthru
        _
    $region44: #{bipartite_gcn_forward.3} parent=5 // pred_fallthru
      _
  $region6: #{bipartite_gcn_forward.3} parent=0 // loop_footer
    %s14 = sadd.s32 1, %s10
  $region7: #{bipartite_gcn_forward.3} parent=0 // loop_footer_branch
    %9 = sbr.rel target = $region3
  $region8: #{bipartite_gcn_forward.3} parent=0 // loop_exit
    _

// kernel: bipartite_gcn_forward.4
$region0: #{bipartite_gcn_forward.4}
  #allocation0 [shape = 'u32[]', space=smem, size = 0x4, offset = 0x4, fixed_abs, tag = 'smem constant byte address 0x4 - core index']
  #allocation1 [shape = 'u32[72,128]{1,0:T(1,128)}', space=vmem, size = 0x9000, scoped, tag = 'internal scratch']
  %s0 = inlined_call_operand.vmem [shape: bf16[2,64,32], index: 0, kind: input, shape index: {}]
  %s1 = inlined_call_operand.vmem [shape: bf16[2,64,32], index: 1, kind: input, shape index: {}]
  %s2 = inlined_call_operand.vmem [shape: bf16[2,32,128], index: 2, kind: input, shape index: {}]
  %s3 = inlined_call_operand.vmem [shape: bf16[2,32,128], index: 3, kind: input, shape index: {}]
  %s4 = inlined_call_operand.vmem [shape: bf16[2,64,128], index: 4, kind: output, shape index: {}]
  %s5 = sld [smem:[#allocation0]]
  $region49: #{bipartite_gcn_forward.4} parent=0
    _
  %s7 = ssub.s32 1, %s5
  %s8 = scalar_select 0, %s7, %s5
  loop: start=0, step=1, limit=4
  $region2: #{bipartite_gcn_forward.4} parent=0 // loop_pre_header
    _
  $region3: #{bipartite_gcn_forward.4} parent=0 // loop_header
    %s10 = sphi 0, %s14
    %p11 = scmp.ge.s32.totalorder %s10, 4
    %s17 = sphi 0, %s29
    %s18 = sphi 0, %s25
    %s19 = sphi 0, %s17
    %s20 = sphi 0, %s18
    %s21 = sphi 0, %s19
    %s22 = sphi 0, %s20
    %s34 = sphi 0, %s36
    %s37 = sphi 0, %s34
    %s38 = sphi 0, %s37
    %s54 = sphi 0, %s38
    %s62 = sphi 0, %s64
    %s65 = sphi 0, %s62
    %s66 = sphi 0, %s65
    %s82 = sphi 0, %s66
    %s88 = sphi 0, %s90
    %s91 = sphi 0, %s88
    %s92 = sphi 0, %s91
    %s108 = sphi 0, %s92
    %s114 = sphi 0, %s116
    %s117 = sphi 0, %s114
    %s118 = sphi 0, %s117
    %s134 = sphi 0, %s118
    %s142 = sphi 0, %s144
    %s145 = sphi 0, %s142
    %s146 = sphi 0, %s145
    %s162 = sphi 0, %s146
  $region4: #{bipartite_gcn_forward.4} parent=0 // loop_header_branch
    %13 = sbr.rel (%p11) target = $region8
  $region5: #{bipartite_gcn_forward.4} parent=0 // loop_body
    %s15 = ssub.s32 %s10, 1
    %s16 = ssub.s32 %s10, 2
    %s23 = sadd.s32 1, %s18
    %p24 = scmp.ge.s32.totalorder %s23, 1
    %s25 = scalar_select %p24, 0, %s23
    %s26 = sadd.s32 1, %s17
    %s27 = scalar_select %p24, %s26, %s17
    %p28 = scmp.ge.s32.totalorder %s27, 2
    %s29 = scalar_select %p28, 0, %s27
    %s30 = ssub.s32 %s17, %s29
    %s31 = ssub.s32 %s18, %s25
    %s32 = sor.u32 %s30, %s31
    %p33 = scmp.eq.s32.totalorder %s32, 0
    %s35 = sadd.s32 %s34, 1
    %s36 = scalar_select %p33, %s34, %s35
    %p39 = pneg %p33
    %p40 = scmp.eq.s32.totalorder %s10, 1
    %p41 = por %p39, %p40
    %p42 = scmp.ne.s32.totalorder %s34, %s37
    %p43 = scmp.eq.s32.totalorder %s10, 0
    %p44 = por %p42, %p43
    %p45 = scmp.ne.s32.totalorder %s34, %s37
    %p46 = scmp.eq.s32.totalorder %s15, 1
    %p47 = por %p45, %p46
    %p48 = scmp.ne.s32.totalorder %s37, %s38
    %p49 = scmp.eq.s32.totalorder %s15, 0
    %p50 = por %p48, %p49
    %p51 = scmp.ne.s32.totalorder %s37, %s38
    %p52 = scmp.eq.s32.totalorder %s16, 1
    %p53 = por %p51, %p52
    %p55 = scmp.ne.s32.totalorder %s38, %s54
    %p56 = scmp.eq.s32.totalorder %s16, 0
    %p57 = por %p55, %p56
    %s58 = ssub.s32 %s17, %s29
    %s59 = ssub.s32 %s18, %s25
    %s60 = sor.u32 %s58, %s59
    %p61 = scmp.eq.s32.totalorder %s60, 0
    %s63 = sadd.s32 %s62, 1
    %s64 = scalar_select %p61, %s62, %s63
    %p67 = pneg %p61
    %p68 = scmp.eq.s32.totalorder %s10, 1
    %p69 = por %p67, %p68
    %p70 = scmp.ne.s32.totalorder %s62, %s65
    %p71 = scmp.eq.s32.totalorder %s10, 0
    %p72 = por %p70, %p71
    %p73 = scmp.ne.s32.totalorder %s62, %s65
    %p74 = scmp.eq.s32.totalorder %s15, 1
    %p75 = por %p73, %p74
    %p76 = scmp.ne.s32.totalorder %s65, %s66
    %p77 = scmp.eq.s32.totalorder %s15, 0
    %p78 = por %p76, %p77
    %p79 = scmp.ne.s32.totalorder %s65, %s66
    %p80 = scmp.eq.s32.totalorder %s16, 1
    %p81 = por %p79, %p80
    %p83 = scmp.ne.s32.totalorder %s66, %s82
    %p84 = scmp.eq.s32.totalorder %s16, 0
    %p85 = por %p83, %p84
    %s86 = ssub.s32 %s17, %s29
    %p87 = scmp.eq.s32.totalorder %s86, 0
    %s89 = sadd.s32 %s88, 1
    %s90 = scalar_select %p87, %s88, %s89
    %p93 = pneg %p87
    %p94 = scmp.eq.s32.totalorder %s10, 1
    %p95 = por %p93, %p94
    %p96 = scmp.ne.s32.totalorder %s88, %s91
    %p97 = scmp.eq.s32.totalorder %s10, 0
    %p98 = por %p96, %p97
    %p99 = scmp.ne.s32.totalorder %s88, %s91
    %p100 = scmp.eq.s32.totalorder %s15, 1
    %p101 = por %p99, %p100
    %p102 = scmp.ne.s32.totalorder %s91, %s92
    %p103 = scmp.eq.s32.totalorder %s15, 0
    %p104 = por %p102, %p103
    %p105 = scmp.ne.s32.totalorder %s91, %s92
    %p106 = scmp.eq.s32.totalorder %s16, 1
    %p107 = por %p105, %p106
    %p109 = scmp.ne.s32.totalorder %s92, %s108
    %p110 = scmp.eq.s32.totalorder %s16, 0
    %p111 = por %p109, %p110
    %s112 = ssub.s32 %s17, %s29
    %p113 = scmp.eq.s32.totalorder %s112, 0
    %s115 = sadd.s32 %s114, 1
    %s116 = scalar_select %p113, %s114, %s115
    %p119 = pneg %p113
    %p120 = scmp.eq.s32.totalorder %s10, 1
    %p121 = por %p119, %p120
    %p122 = scmp.ne.s32.totalorder %s114, %s117
    %p123 = scmp.eq.s32.totalorder %s10, 0
    %p124 = por %p122, %p123
    %p125 = scmp.ne.s32.totalorder %s114, %s117
    %p126 = scmp.eq.s32.totalorder %s15, 1
    %p127 = por %p125, %p126
    %p128 = scmp.ne.s32.totalorder %s117, %s118
    %p129 = scmp.eq.s32.totalorder %s15, 0
    %p130 = por %p128, %p129
    %p131 = scmp.ne.s32.totalorder %s117, %s118
    %p132 = scmp.eq.s32.totalorder %s16, 1
    %p133 = por %p131, %p132
    %p135 = scmp.ne.s32.totalorder %s118, %s134
    %p136 = scmp.eq.s32.totalorder %s16, 0
    %p137 = por %p135, %p136
    %s138 = ssub.s32 %s17, %s29
    %s139 = ssub.s32 %s18, %s25
    %s140 = sor.u32 %s138, %s139
    %p141 = scmp.eq.s32.totalorder %s140, 0
    %s143 = sadd.s32 %s142, 1
    %s144 = scalar_select %p141, %s142, %s143
    %p147 = pneg %p141
    %p148 = scmp.eq.s32.totalorder %s10, 1
    %p149 = por %p147, %p148
    %p150 = scmp.ne.s32.totalorder %s142, %s145
    %p151 = scmp.eq.s32.totalorder %s10, 0
    %p152 = por %p150, %p151
    %p153 = scmp.ne.s32.totalorder %s142, %s145
    %p154 = scmp.eq.s32.totalorder %s15, 1
    %p155 = por %p153, %p154
    %p156 = scmp.ne.s32.totalorder %s145, %s146
    %p157 = scmp.eq.s32.totalorder %s15, 0
    %p158 = por %p156, %p157
    %p159 = scmp.ne.s32.totalorder %s145, %s146
    %p160 = scmp.eq.s32.totalorder %s16, 1
    %p161 = por %p159, %p160
    %p163 = scmp.ne.s32.totalorder %s146, %s162
    %p164 = scmp.eq.s32.totalorder %s16, 0
    %p165 = por %p163, %p164
    %p166 = scmp.le.s32.totalorder 1, %s10
    %p167 = scmp.lt.s32.totalorder %s10, 3
    %p168 = pnand %p166, %p167
    %p169 = pneg %p168
    // Predicated region
    $region9: #{bipartite_gcn_forward.4} parent=5 // pred_check
      _
    $region10: #{bipartite_gcn_forward.4} parent=5 // pred_check_branch
      %171 = sbr.rel (%p168) target = $region12
    $region11: #{bipartite_gcn_forward.4} parent=5 // pred_region
      %s172 = ssub.s32 %s10, 1
    $region12: #{bipartite_gcn_forward.4} parent=5 // pred_fallthru
      _
    %p173 = scmp.lt.s32.totalorder %s10, 2
    // Predicated region
    $region13: #{bipartite_gcn_forward.4} parent=5 // pred_check
      %p174 = pneg %p173
    $region14: #{bipartite_gcn_forward.4} parent=5 // pred_check_branch
      %176 = sbr.rel (%p174) target = $region16
    $region15: #{bipartite_gcn_forward.4} parent=5 // pred_region
      // Predicated region
      $region17: #{bipartite_gcn_forward.4} parent=15 // pred_check
        %p177 = pneg %p44
      $region18: #{bipartite_gcn_forward.4} parent=15 // pred_check_branch
        %179 = sbr.rel (%p177) target = $region20
      $region19: #{bipartite_gcn_forward.4} parent=15 // pred_region
        %s180 = smul.u32 8, %s18
        %p181 = scmp.lt.s32.totalorder %s17, 1
        %s182 = scalar_select %p181, %s17, 1
        %p183 = scmp.lt.s32.totalorder %s180, 7
        %s184 = scalar_select %p183, %s180, 7
        %s185 = smul.addr %s182, 8
        %s186 = sadd.s32 %s184, %s185
        %s187 = smul.addr %s186, 4
        %s188 = scalar_lea.vmem %s0, %s187
        %s189 = smul.u32 8, %s18
      $region20: #{bipartite_gcn_forward.4} parent=15 // pred_fallthru
        _
      // Predicated region
      $region21: #{bipartite_gcn_forward.4} parent=15 // pred_check
        %p190 = pneg %p72
      $region22: #{bipartite_gcn_forward.4} parent=15 // pred_check_branch
        %192 = sbr.rel (%p190) target = $region24
      $region23: #{bipartite_gcn_forward.4} parent=15 // pred_region
        %s193 = smul.u32 8, %s18
        %p194 = scmp.lt.s32.totalorder %s17, 1
        %s195 = scalar_select %p194, %s17, 1
        %p196 = scmp.lt.s32.totalorder %s193, 7
        %s197 = scalar_select %p196, %s193, 7
        %s198 = smul.addr %s195, 8
        %s199 = sadd.s32 %s197, %s198
        %s200 = smul.addr %s199, 4
        %s201 = scalar_lea.vmem %s1, %s200
        %s202 = smul.u32 8, %s18
      $region24: #{bipartite_gcn_forward.4} parent=15 // pred_fallthru
        _
      // Predicated region
      $region25: #{bipartite_gcn_forward.4} parent=15 // pred_check
        %p203 = pneg %p98
      $region26: #{bipartite_gcn_forward.4} parent=15 // pred_check_branch
        %205 = sbr.rel (%p203) target = $region28
      $region27: #{bipartite_gcn_forward.4} parent=15 // pred_region
        %p206 = scmp.lt.s32.totalorder %s17, 1
        %s207 = scalar_select %p206, %s17, 1
        %s208 = smul.addr %s207, 4
        %s209 = smul.addr %s208, 4
        %s210 = scalar_lea.vmem %s2, %s209
      $region28: #{bipartite_gcn_forward.4} parent=15 // pred_fallthru
        _
      // Predicated region
      $region29: #{bipartite_gcn_forward.4} parent=15 // pred_check
        %p211 = pneg %p124
      $region30: #{bipartite_gcn_forward.4} parent=15 // pred_check_branch
        %213 = sbr.rel (%p211) target = $region32
      $region31: #{bipartite_gcn_forward.4} parent=15 // pred_region
        %p214 = scmp.lt.s32.totalorder %s17, 1
        %s215 = scalar_select %p214, %s17, 1
        %s216 = smul.addr %s215, 4
        %s217 = smul.addr %s216, 4
        %s218 = scalar_lea.vmem %s3, %s217
      $region32: #{bipartite_gcn_forward.4} parent=15 // pred_fallthru
        _
    $region16: #{bipartite_gcn_forward.4} parent=5 // pred_fallthru
      _
    %p219 = scmp.le.s32.totalorder 1, %s10
    %p220 = scmp.lt.s32.totalorder %s10, 3
    %p221 = pnand %p219, %p220
    %p222 = pneg %p221
    // Predicated region
    $region33: #{bipartite_gcn_forward.4} parent=5 // pred_check
      _
    $region34: #{bipartite_gcn_forward.4} parent=5 // pred_check_branch
      %224 = sbr.rel (%p221) target = $region36
    $region35: #{bipartite_gcn_forward.4} parent=5 // pred_region
      %s225 = ssub.s32 %s10, 1
      %s226 = smul.u32 8, %s20
      %p227 = scmp.lt.s32.totalorder %s19, 1
      %s228 = scalar_select %p227, %s19, 1
      %p229 = scmp.lt.s32.totalorder %s226, 7
      %s230 = scalar_select %p229, %s226, 7
      %s231 = smul.addr %s228, 8
      %s232 = sadd.s32 %s230, %s231
      %s233 = smul.addr %s232, 4
      %s234 = scalar_lea.vmem %s0, %s233
      %p235 = pneg %p50
      %p236 = pneg %p47
      %s237 = smul.u32 8, %s20
      %p238 = scmp.lt.s32.totalorder %s19, 1
      %s239 = scalar_select %p238, %s19, 1
      %p240 = scmp.lt.s32.totalorder %s237, 7
      %s241 = scalar_select %p240, %s237, 7
      %s242 = smul.addr %s239, 8
      %s243 = sadd.s32 %s241, %s242
      %s244 = smul.addr %s243, 4
      %s245 = scalar_lea.vmem %s1, %s244
      %p246 = pneg %p78
      %p247 = pneg %p75
      %p248 = scmp.lt.s32.totalorder %s19, 1
      %s249 = scalar_select %p248, %s19, 1
      %s250 = smul.addr %s249, 4
      %s251 = smul.addr %s250, 4
      %s252 = scalar_lea.vmem %s2, %s251
      %p253 = pneg %p104
      %p254 = pneg %p101
      %p255 = scmp.lt.s32.totalorder %s19, 1
      %s256 = scalar_select %p255, %s19, 1
      %s257 = smul.addr %s256, 4
      %s258 = smul.addr %s257, 4
      %s259 = scalar_lea.vmem %s3, %s258
      %p260 = pneg %p130
      %p261 = pneg %p127
      %p262 = pneg %p158
      %p263 = pneg %p155
      %s264 = smul.u32 8, %s20
      %p265 = scmp.lt.s32.totalorder %s19, 1
      %s266 = scalar_select %p265, %s19, 1
      %p267 = scmp.lt.s32.totalorder %s264, 7
      %s268 = scalar_select %p267, %s264, 7
      %s269 = smul.addr %s266, 8
      %s270 = sadd.s32 %s268, %s269
      %s271 = smul.addr %s270, 4
      %s272 = scalar_lea.vmem %s4, %s271
      %s273 = smul.u32 8, %s20
      %p274 = scmp.lt.s32.totalorder %s19, 1
      %s275 = scalar_select %p274, %s19, 1
      %p276 = scmp.lt.s32.totalorder %s273, 7
      %s277 = scalar_select %p276, %s273, 7
      %s278 = smul.addr %s275, 8
      %s279 = sadd.s32 %s277, %s278
      %s280 = smul.addr %s279, 4
      %s281 = scalar_lea.vmem %s0, %s280
      %s282 = smul.u32 8, %s20
      %s283 = smul.u32 8, %s20
      %p284 = scmp.lt.s32.totalorder %s19, 1
      %s285 = scalar_select %p284, %s19, 1
      %p286 = scmp.lt.s32.totalorder %s283, 7
      %s287 = scalar_select %p286, %s283, 7
      %s288 = smul.addr %s285, 8
      %s289 = sadd.s32 %s287, %s288
      %s290 = smul.addr %s289, 4
      %s291 = scalar_lea.vmem %s1, %s290
      %s292 = smul.u32 8, %s20
      %p293 = scmp.lt.s32.totalorder %s19, 1
      %s294 = scalar_select %p293, %s19, 1
      %s295 = smul.addr %s294, 4
      %s296 = smul.addr %s295, 4
      %s297 = scalar_lea.vmem %s2, %s296
      %p298 = scmp.lt.s32.totalorder %s19, 1
      %s299 = scalar_select %p298, %s19, 1
      %s300 = smul.addr %s299, 4
      %s301 = smul.addr %s300, 4
      %s302 = scalar_lea.vmem %s3, %s301
      %s303 = smul.u32 8, %s20
      %p304 = scmp.lt.s32.totalorder %s19, 1
      %s305 = scalar_select %p304, %s19, 1
      %p306 = scmp.lt.s32.totalorder %s303, 7
      %s307 = scalar_select %p306, %s303, 7
      %s308 = smul.addr %s305, 8
      %s309 = sadd.s32 %s307, %s308
      %s310 = smul.addr %s309, 4
      %s311 = scalar_lea.vmem %s4, %s310
      %s312 = smul.u32 8, %s20
      %v314 = vld [vmem:[%s281] sm:$0xf]
      %v315 = vld [vmem:[%s281 + $0x4] sm:$0xf]
      %v316 = vld [vmem:[%s281 + $0x8] sm:$0xf]
      %v317 = vld [vmem:[%s281 + $0xc] sm:$0xf]
      %v318 = vld [vmem:[%s281 + $0x10] sm:$0xf]
      %v319 = vld [vmem:[%s281 + $0x14] sm:$0xf]
      %v320 = vld [vmem:[%s281 + $0x18] sm:$0xf]
      %v321 = vld [vmem:[%s281 + $0x1c] sm:$0xf]
      %v322 = vld [vmem:[%s297] sm:$0xf]
      %v323 = vld [vmem:[%s297 + $0x4] sm:$0xf]
      %v324 = vld [vmem:[%s297 + $0x8] sm:$0xf]
      %v325 = vld [vmem:[%s297 + $0xc] sm:$0xf]
      %v326 = vld [vmem:[%s291] sm:$0xf]
      %v327 = vld [vmem:[%s291 + $0x4] sm:$0xf]
      %v328 = vld [vmem:[%s291 + $0x8] sm:$0xf]
      %v329 = vld [vmem:[%s291 + $0xc] sm:$0xf]
      %v330 = vld [vmem:[%s291 + $0x10] sm:$0xf]
      %v331 = vld [vmem:[%s291 + $0x14] sm:$0xf]
      %v332 = vld [vmem:[%s291 + $0x18] sm:$0xf]
      %v333 = vld [vmem:[%s291 + $0x1c] sm:$0xf]
      %v334 = vld [vmem:[%s302] sm:$0xf]
      %v335 = vld [vmem:[%s302 + $0x4] sm:$0xf]
      %v336 = vld [vmem:[%s302 + $0x8] sm:$0xf]
      %v337 = vld [vmem:[%s302 + $0xc] sm:$0xf]
      %v346 = vunpack.c.l.b16 %v326
      %v347 = vunpack.c.l.b16 %v327
      %v348 = vunpack.c.l.b16 %v328
      %v349 = vunpack.c.l.b16 %v329
      %v350 = vunpack.c.l.b16 %v330
      %v351 = vunpack.c.l.b16 %v331
      %v352 = vunpack.c.l.b16 %v332
      %v353 = vunpack.c.l.b16 %v333
      %v354 = vpack.c.b16 %v347, %v346
      %v355 = vpack.c.b16 %v349, %v348
      %v356 = vpack.c.b16 %v351, %v350
      %v357 = vpack.c.b16 %v353, %v352
      %v362 = vunpack.c.l.b16 %v334
      %v363 = vunpack.c.l.b16 %v335
      %v364 = vunpack.c.l.b16 %v336
      %v365 = vunpack.c.l.b16 %v337
      %v366 = vpack.c.b16 %v363, %v362
      %v367 = vpack.c.b16 %v365, %v364
      %vm370 = vcmask 261120
      %v372 = vsel %vm370, %v354, 0
      %v375 = vsel %vm370, %v355, 0
      %v378 = vsel %vm370, %v356, 0
      %v381 = vsel %vm370, %v357, 0
      %383 = vmatpush.bf16.msra.mxu0 0
      %384 = vmatpush.bf16.msra.mxu0 0
      %385 = vmatpush.bf16.msra.mxu0 0
      %386 = vmatpush.bf16.msra.mxu0 0
      %387 = vmatpush.bf16.msra.mxu0 0
      %388 = vmatpush.bf16.msra.mxu0 0
      %389 = vmatpush.bf16.msra.mxu0 %v367
      %390 = vmatpush.bf16.msra.mxu0 %v366
      %391 = vmatmul.bf16.gmra.mxu0 %v372
      %v392 = vpop.f32.mrf.mxu0
      %v393 = vadd.f32 0.0, %v392
      %v394 = vpop.f32.mrf.mxu0
      %v395 = vadd.f32 0.0, %v394
      %396 = vmatmul.bf16.gmra.mxu0 %v375
      %v397 = vpop.f32.mrf.mxu0
      %v398 = vadd.f32 0.0, %v397
      %v399 = vpop.f32.mrf.mxu0
      %v400 = vadd.f32 0.0, %v399
      %401 = vmatmul.bf16.gmra.mxu0 %v378
      %v402 = vpop.f32.mrf.mxu0
      %v403 = vadd.f32 0.0, %v402
      %v404 = vpop.f32.mrf.mxu0
      %v405 = vadd.f32 0.0, %v404
      %406 = vmatmul.bf16.gmra.mxu0 %v381
      %v407 = vpop.f32.mrf.mxu0
      %v408 = vadd.f32 0.0, %v407
      %v409 = vpop.f32.mrf.mxu0
      %v410 = vadd.f32 0.0, %v409
      %411 = vdwg.mxu0
      %v420 = vunpack.c.l.b16 %v314
      %v421 = vunpack.c.l.b16 %v315
      %v422 = vunpack.c.l.b16 %v316
      %v423 = vunpack.c.l.b16 %v317
      %v424 = vunpack.c.l.b16 %v318
      %v425 = vunpack.c.l.b16 %v319
      %v426 = vunpack.c.l.b16 %v320
      %v427 = vunpack.c.l.b16 %v321
      %v428 = vpack.c.b16 %v421, %v420
      %v429 = vpack.c.b16 %v423, %v422
      %v430 = vpack.c.b16 %v425, %v424
      %v431 = vpack.c.b16 %v427, %v426
      %v436 = vunpack.c.l.b16 %v322
      %v437 = vunpack.c.l.b16 %v323
      %v438 = vunpack.c.l.b16 %v324
      %v439 = vunpack.c.l.b16 %v325
      %v440 = vpack.c.b16 %v437, %v436
      %v441 = vpack.c.b16 %v439, %v438
      %v445 = vsel %vm370, %v428, 0
      %v448 = vsel %vm370, %v429, 0
      %v451 = vsel %vm370, %v430, 0
      %v454 = vsel %vm370, %v431, 0
      %456 = vmatpush.bf16.msra.mxu0 0
      %457 = vmatpush.bf16.msra.mxu0 0
      %458 = vmatpush.bf16.msra.mxu0 0
      %459 = vmatpush.bf16.msra.mxu0 0
      %460 = vmatpush.bf16.msra.mxu0 0
      %461 = vmatpush.bf16.msra.mxu0 0
      %462 = vmatpush.bf16.msra.mxu0 %v441
      %463 = vmatpush.bf16.msra.mxu0 %v440
      %464 = vmatmul.bf16.gmra.mxu0 %v445
      %v465 = vpop.f32.mrf.mxu0
      %v466 = vadd.f32 %v393, %v465
      %v467 = vpop.f32.mrf.mxu0
      %v468 = vadd.f32 %v395, %v467
      %469 = vmatmul.bf16.gmra.mxu0 %v448
      %v470 = vpop.f32.mrf.mxu0
      %v471 = vadd.f32 %v398, %v470
      %v472 = vpop.f32.mrf.mxu0
      %v473 = vadd.f32 %v400, %v472
      %474 = vmatmul.bf16.gmra.mxu0 %v451
      %v475 = vpop.f32.mrf.mxu0
      %v476 = vadd.f32 %v403, %v475
      %v477 = vpop.f32.mrf.mxu0
      %v478 = vadd.f32 %v405, %v477
      %479 = vmatmul.bf16.gmra.mxu0 %v454
      %v480 = vpop.f32.mrf.mxu0
      %v481 = vadd.f32 %v408, %v480
      %v482 = vpop.f32.mrf.mxu0
      %v483 = vadd.f32 %v410, %v482
      %484 = vdwg.mxu0
      %v485 = vmax.f32 %v466, 0.0
      %v486 = vmax.f32 %v468, 0.0
      %v487 = vmax.f32 %v471, 0.0
      %v488 = vmax.f32 %v473, 0.0
      %v489 = vmax.f32 %v476, 0.0
      %v490 = vmax.f32 %v478, 0.0
      %v491 = vmax.f32 %v481, 0.0
      %v492 = vmax.f32 %v483, 0.0
      %v493 = vpack.c.bf16 %v485, %v485
      %v494 = vpack.c.bf16 %v486, %v486
      %v495 = vpack.c.bf16 %v487, %v487
      %v496 = vpack.c.bf16 %v488, %v488
      %v497 = vpack.c.bf16 %v489, %v489
      %v498 = vpack.c.bf16 %v490, %v490
      %v499 = vpack.c.bf16 %v491, %v491
      %v500 = vpack.c.bf16 %v492, %v492
      %501 = vst [vmem:[%s311] sm:$0xf] %v493
      %502 = vst [vmem:[%s311 + $0x4] sm:$0xf] %v494
      %503 = vst [vmem:[%s311 + $0x8] sm:$0xf] %v495
      %504 = vst [vmem:[%s311 + $0xc] sm:$0xf] %v496
      %505 = vst [vmem:[%s311 + $0x10] sm:$0xf] %v497
      %506 = vst [vmem:[%s311 + $0x14] sm:$0xf] %v498
      %507 = vst [vmem:[%s311 + $0x18] sm:$0xf] %v499
      %508 = vst [vmem:[%s311 + $0x1c] sm:$0xf] %v500
      %s509 = smul.u32 8, %s20
      %p510 = scmp.lt.s32.totalorder %s19, 1
      %s511 = scalar_select %p510, %s19, 1
      %p512 = scmp.lt.s32.totalorder %s509, 7
      %s513 = scalar_select %p512, %s509, 7
      %s514 = smul.addr %s511, 8
      %s515 = sadd.s32 %s513, %s514
      %s516 = smul.addr %s515, 4
      %s517 = scalar_lea.vmem %s4, %s516
      // Predicated region
      $region37: #{bipartite_gcn_forward.4} parent=35 // pred_check
        %p518 = pneg %p155
      $region38: #{bipartite_gcn_forward.4} parent=35 // pred_check_branch
        %520 = sbr.rel (%p518) target = $region40
      $region39: #{bipartite_gcn_forward.4} parent=35 // pred_region
        %s521 = smul.u32 8, %s20
      $region40: #{bipartite_gcn_forward.4} parent=35 // pred_fallthru
        _
    $region36: #{bipartite_gcn_forward.4} parent=5 // pred_fallthru
      _
    %p522 = scmp.le.s32.totalorder 2, %s10
    // Predicated region
    $region41: #{bipartite_gcn_forward.4} parent=5 // pred_check
      %p523 = pneg %p522
    $region42: #{bipartite_gcn_forward.4} parent=5 // pred_check_branch
      %525 = sbr.rel (%p523) target = $region44
    $region43: #{bipartite_gcn_forward.4} parent=5 // pred_region
      %s526 = ssub.s32 %s10, 2
      // Predicated region
      $region45: #{bipartite_gcn_forward.4} parent=43 // pred_check
        %p527 = pneg %p161
      $region46: #{bipartite_gcn_forward.4} parent=43 // pred_check_branch
        %529 = sbr.rel (%p527) target = $region48
      $region47: #{bipartite_gcn_forward.4} parent=43 // pred_region
        %s530 = smul.u32 8, %s22
        %p531 = scmp.lt.s32.totalorder %s21, 1
        %s532 = scalar_select %p531, %s21, 1
        %p533 = scmp.lt.s32.totalorder %s530, 7
        %s534 = scalar_select %p533, %s530, 7
        %s535 = smul.addr %s532, 8
        %s536 = sadd.s32 %s534, %s535
        %s537 = smul.addr %s536, 4
        %s538 = scalar_lea.vmem %s4, %s537
      $region48: #{bipartite_gcn_forward.4} parent=43 // pred_fallthru
        _
    $region44: #{bipartite_gcn_forward.4} parent=5 // pred_fallthru
      _
  $region6: #{bipartite_gcn_forward.4} parent=0 // loop_footer
    %s14 = sadd.s32 1, %s10
  $region7: #{bipartite_gcn_forward.4} parent=0 // loop_footer_branch
    %9 = sbr.rel target = $region3
  $region8: #{bipartite_gcn_forward.4} parent=0 // loop_exit
    _

</llo_original>
